<compile_context>
chip_gen: v7x
topology: tpu7x:2x2x1
jax: 0.10.0
libtpu: 0.0.40
codegen_flags: <defaults>
</compile_context>

<pallas_src>
import math
import functools

import jax
import jax.numpy as jnp
from jax import lax
from jax.experimental import pallas as pl
from jax.experimental.pallas import tpu as pltpu

F32 = jnp.float32
_EPS = 1e-5  # PyTorch BatchNorm2d default


def _round_up(v, m):
    return v + ((-v) % m)


def _fused_head_kernel(x_ref, g_ref, b_ref, w_ref, fcb_ref, logit_ref, pred_ref,
                       *, n, hw, classes, eps):
    """x_ref   : (hw*n, C) f32  spatial-major BN rows (row index = (h*W+w)*n + sample)
       g_ref   : (1, C)    f32  BN gamma
       b_ref   : (1, C)    f32  BN beta
       w_ref   : (hw*C, Np) bf16 permuted + lane-padded FC weight
       fcb_ref : (1, Np)   f32  lane-padded FC bias
       logit_ref : (n, classes) f32  logits (unpadded)
       pred_ref  : (n, 1)  int32 argmax class per sample"""
    rows = x_ref.shape[0]
    chan = x_ref.shape[1]
    np_lanes = w_ref.shape[1]

    x = x_ref[...]                                         # (hw*n, C), stays in vregs
    # Training-mode BatchNorm statistics, single pass (biased variance, clamped so
    # cancellation can never make rsqrt(var+eps) NaN).
    inv_r = jnp.float32(1.0 / rows)
    mean = jnp.sum(x, axis=0, keepdims=True) * inv_r
    ex2 = jnp.sum(x * x, axis=0, keepdims=True) * inv_r
    var = jnp.maximum(ex2 - mean * mean, 0.0)
    scale = g_ref[...] * lax.rsqrt(var + eps)              # (1, C)
    shift = b_ref[...] - mean * scale                      # (1, C)
    y = x * scale + shift                                  # BN affine applied once

    # FC matmul: bias-initialized f32 accumulator, bf16 operands feeding the MXU.
    acc = jnp.broadcast_to(fcb_ref[...], (n, np_lanes))
    for p in range(hw):                                    # static tiny spatial extent
        ys = y[p * n:(p + 1) * n, :].astype(jnp.bfloat16)  # (n, C) samples at spatial p
        wp = w_ref[p * chan:(p + 1) * chan, :]             # (C, Np) bf16 weight block
        acc = acc + jnp.dot(ys, wp, preferred_element_type=jnp.float32)

    # Fused epilogue: mask padded class lanes to -inf, per-row argmax (first maximum).
    lane = lax.broadcasted_iota(jnp.int32, (n, np_lanes), 1)
    masked = jnp.where(lane < classes, acc, -jnp.inf)
    row_max = jnp.max(masked, axis=1, keepdims=True)
    first_hit = jnp.where(masked == row_max, lane, np_lanes)
    pred = jnp.min(first_hit, axis=1, keepdims=True)

    logit_ref[...] = acc[:, :classes]
    pred_ref[...] = pred.astype(jnp.int32)


def prepare_head_params(params, *, C, H, W):
    """One-time (load-time) parameter prep, hoisted out of the hot forward path.

    Permutes the PyTorch (classes, C*H*W) FC weight (NCHW-flatten order) into a
    spatial-major (H*W*C, Np) bf16 matrix whose row index (h*W + w)*C + c matches the
    kernel's activation layout, lane-pads classes to a multiple of 128, pads the bias
    and reshapes the BN affine to (1, C)."""
    classes = params["fc_b"].shape[0]
    HW = H * W
    Np = _round_up(classes, 128)
    w = params["fc_w"].astype(F32).reshape(classes, C, H, W)
    w = jnp.transpose(w, (2, 3, 1, 0)).reshape(HW * C, classes)
    w = jnp.pad(w, ((0, 0), (0, Np - classes))).astype(jnp.bfloat16)
    fc_b = jnp.pad(params["fc_b"].astype(F32), (0, Np - classes)).reshape(1, Np)
    return {
        "w": w,
        "fc_b": fc_b,
        "bn_g": params["bn_g"].astype(F32).reshape(1, C),
        "bn_b": params["bn_b"].astype(F32).reshape(1, C),
    }


def classification_head_forward(x_nchw, prepped, *, classes):
    """ClassificationHead.forward: BN(batch stats) -> NCHW flatten -> Linear -> argmax.
    `prepped` comes from prepare_head_params (run once at load time)."""
    N, C, H, W = x_nchw.shape
    HW = H * W
    assert prepped["w"].shape[0] == HW * C

    # Spatial-major activation rows: (N,C,H,W) -> (H,W,N,C) -> (H*W*N, C) so BN stats
    # are a plain per-column reduction and each spatial position's N sample rows are a
    # contiguous slice.  allow_input_fusion lets XLA fold this relayout into the call.
    x_rows = jnp.transpose(x_nchw.astype(F32), (2, 3, 0, 1)).reshape(HW * N, C)

    # TODO(synk): for large N*H*W (activations no longer VMEM-resident) switch to a
    # grid-tiled two-pass BN + tiled matmul sized first for v7x's 64 MiB VMEM
    # (explicit vmem_limit_bytes), and add a leading "parallel" grid dim over N so
    # both v7x TensorCores get work.  At classification-head shapes a single gridless
    # launch (<1 MiB working set) is fastest on all generations.
    kernel = functools.partial(_fused_head_kernel, n=N, hw=HW, classes=classes, eps=_EPS)
    logits, preds = pl.pallas_call(
        kernel,
        out_shape=(
            jax.ShapeDtypeStruct((N, classes), F32),
            jax.ShapeDtypeStruct((N, 1), jnp.int32),
        ),
        compiler_params=pltpu.CompilerParams(
            # one bool per input: allow the activation-relayout producer (input 0) to fuse
            allow_input_fusion=[True, False, False, False, False],
        ),
    )(x_rows, prepped["bn_g"], prepped["bn_b"], prepped["w"], prepped["fc_b"])
    return logits, preds[:, 0]


def _reference(x, params):
    """Plain-JAX f32 replica of the PyTorch forward (training-mode BN) for validation."""
    N, C, H, W = x.shape
    mean = jnp.mean(x, axis=(0, 2, 3), keepdims=True)
    var = jnp.mean(jnp.square(x - mean), axis=(0, 2, 3), keepdims=True)
    y = (x - mean) / jnp.sqrt(var + _EPS)
    y = y * params["bn_g"].reshape(1, C, 1, 1) + params["bn_b"].reshape(1, C, 1, 1)
    feats = y.reshape(N, -1)
    logits = feats @ params["fc_w"].T + params["fc_b"]
    return logits, jnp.argmax(logits, axis=1)


if __name__ == "__main__":
    key = jax.random.PRNGKey(0)
    kx, kw, kb = jax.random.split(key, 3)

    # BatchNorm2d(256) pins the channel count; 2x2 spatial -> in_ch = 256*2*2 = 1024.
    N, C, H, W = 2, 256, 2, 2
    classes = 100
    in_ch = C * H * W

    bound = 1.0 / math.sqrt(in_ch)  # PyTorch Linear default uniform bound
    params = {
        "bn_g": jnp.ones((C,), F32),
        "bn_b": jnp.zeros((C,), F32),
        "fc_w": jax.random.uniform(kw, (classes, in_ch), F32, minval=-bound, maxval=bound),
        "fc_b": jax.random.uniform(kb, (classes,), F32, minval=-bound, maxval=bound),
    }
    x = jax.random.normal(kx, (N, C, H, W), dtype=F32)

    # One-time parameter prep (load time), hoisted out of the per-call forward.
    prepped = prepare_head_params(params, C=C, H=H, W=W)
    jax.block_until_ready(prepped)

    fwd = jax.jit(functools.partial(classification_head_forward, classes=classes))
    logits, preds = fwd(x, prepped)
    jax.block_until_ready((logits, preds))

    assert logits.shape == (N, classes)
    assert preds.shape == (N,)

    ref_logits, ref_preds = _reference(x, params)
    max_diff = float(jnp.max(jnp.abs(logits - ref_logits)))
    # bf16 weight/activation feed with f32 accumulation over K=1024 -> loosened tolerance.
    assert jnp.allclose(logits, ref_logits, atol=2e-2, rtol=2e-2), max_diff
    # Fused in-kernel argmax is self-consistent with the emitted logits...
    assert bool(jnp.all(preds == jnp.argmax(logits, axis=1)))
    # ...and matches the f32 reference predictions.
    assert bool(jnp.all(preds == ref_preds))

    print("KERNEL_OK")
</pallas_src>

<mosaic_0001>
module attributes {stable_mosaic.version = 11 : i64} {
  func.func @_fused_head_kernel(%arg0: memref<8x256xf32, #tpu.memory_space<vmem>>, %arg1: memref<1x256xf32, #tpu.memory_space<vmem>>, %arg2: memref<1x256xf32, #tpu.memory_space<vmem>>, %arg3: memref<1024x128xbf16, #tpu.memory_space<vmem>>, %arg4: memref<1x128xf32, #tpu.memory_space<vmem>>, %arg5: memref<2x100xf32, #tpu.memory_space<vmem>>, %arg6: memref<2x1xi32, #tpu.memory_space<vmem>>) attributes {dimension_semantics = [], scalar_prefetch = 0 : i64, scratch_operands = 0 : i64, tpu.core_type = #tpu.core_type<tc>} {
    %c0 = arith.constant 0 : index
    %c0_0 = arith.constant 0 : index
    %0 = vector.load %arg0[%c0, %c0_0] : memref<8x256xf32, #tpu.memory_space<vmem>>, vector<8x256xf32>
    %cst = arith.constant dense<0.000000e+00> : vector<256xf32>
    %1 = vector.multi_reduction <add>, %0, %cst [0] : vector<8x256xf32> to vector<256xf32>
    %2 = vector.shape_cast %1 : vector<256xf32> to vector<1x256xf32>
    %cst_1 = arith.constant 1.250000e-01 : f32
    %3 = vector.broadcast %cst_1 : f32 to vector<1x256xf32>
    %4 = arith.mulf %2, %3 : vector<1x256xf32>
    %5 = arith.mulf %0, %0 : vector<8x256xf32>
    %cst_2 = arith.constant dense<0.000000e+00> : vector<256xf32>
    %6 = vector.multi_reduction <add>, %5, %cst_2 [0] : vector<8x256xf32> to vector<256xf32>
    %7 = vector.shape_cast %6 : vector<256xf32> to vector<1x256xf32>
    %cst_3 = arith.constant 1.250000e-01 : f32
    %8 = vector.broadcast %cst_3 : f32 to vector<1x256xf32>
    %9 = arith.mulf %7, %8 : vector<1x256xf32>
    %10 = arith.mulf %4, %4 : vector<1x256xf32>
    %11 = arith.subf %9, %10 : vector<1x256xf32>
    %cst_4 = arith.constant 0.000000e+00 : f32
    %12 = vector.broadcast %cst_4 : f32 to vector<1x256xf32>
    %13 = arith.maximumf %11, %12 : vector<1x256xf32>
    %c0_5 = arith.constant 0 : index
    %c0_6 = arith.constant 0 : index
    %14 = vector.load %arg1[%c0_5, %c0_6] : memref<1x256xf32, #tpu.memory_space<vmem>>, vector<1x256xf32>
    %cst_7 = arith.constant 9.99999974E-6 : f32
    %15 = vector.broadcast %cst_7 : f32 to vector<1x256xf32>
    %16 = arith.addf %13, %15 : vector<1x256xf32>
    %17 = math.rsqrt %16 : vector<1x256xf32>
    %18 = arith.mulf %14, %17 : vector<1x256xf32>
    %c0_8 = arith.constant 0 : index
    %c0_9 = arith.constant 0 : index
    %19 = vector.load %arg2[%c0_8, %c0_9] : memref<1x256xf32, #tpu.memory_space<vmem>>, vector<1x256xf32>
    %20 = arith.mulf %4, %18 : vector<1x256xf32>
    %21 = arith.subf %19, %20 : vector<1x256xf32>
    %22 = vector.broadcast %18 : vector<1x256xf32> to vector<8x256xf32>
    %23 = arith.mulf %0, %22 : vector<8x256xf32>
    %24 = vector.broadcast %21 : vector<1x256xf32> to vector<8x256xf32>
    %25 = arith.addf %23, %24 : vector<8x256xf32>
    %c0_10 = arith.constant 0 : index
    %c0_11 = arith.constant 0 : index
    %26 = vector.load %arg4[%c0_10, %c0_11] : memref<1x128xf32, #tpu.memory_space<vmem>>, vector<1x128xf32>
    %27 = vector.shape_cast %26 : vector<1x128xf32> to vector<1x128xf32>
    %28 = vector.broadcast %27 : vector<1x128xf32> to vector<2x128xf32>
    %29 = vector.extract_strided_slice %25 {offsets = [0, 0], sizes = [2, 256], strides = [1, 1]} : vector<8x256xf32> to vector<2x256xf32>
    %30 = arith.truncf %29 : vector<2x256xf32> to vector<2x256xbf16>
    %c0_12 = arith.constant 0 : index
    %c0_13 = arith.constant 0 : index
    %31 = vector.load %arg3[%c0_12, %c0_13] : memref<1024x128xbf16, #tpu.memory_space<vmem>>, vector<256x128xbf16>
    %cst_14 = arith.constant dense<0.000000e+00> : vector<2x128xf32>
    %32 = tpu.matmul %30, %31, %cst_14 {dimension_numbers = #tpu.dot_dimension_numbers<[1], [0], [0], [1], [0, 0, 1, 1], [], []>} : vector<2x256xbf16>, vector<256x128xbf16>, vector<2x128xf32> -> vector<2x128xf32>
    %33 = arith.addf %28, %32 : vector<2x128xf32>
    %34 = vector.extract_strided_slice %25 {offsets = [2, 0], sizes = [2, 256], strides = [1, 1]} : vector<8x256xf32> to vector<2x256xf32>
    %35 = arith.truncf %34 : vector<2x256xf32> to vector<2x256xbf16>
    %c256 = arith.constant 256 : index
    %c0_15 = arith.constant 0 : index
    %36 = vector.load %arg3[%c256, %c0_15] : memref<1024x128xbf16, #tpu.memory_space<vmem>>, vector<256x128xbf16>
    %cst_16 = arith.constant dense<0.000000e+00> : vector<2x128xf32>
    %37 = tpu.matmul %35, %36, %cst_16 {dimension_numbers = #tpu.dot_dimension_numbers<[1], [0], [0], [1], [0, 0, 1, 1], [], []>} : vector<2x256xbf16>, vector<256x128xbf16>, vector<2x128xf32> -> vector<2x128xf32>
    %38 = arith.addf %33, %37 : vector<2x128xf32>
    %39 = vector.extract_strided_slice %25 {offsets = [4, 0], sizes = [2, 256], strides = [1, 1]} : vector<8x256xf32> to vector<2x256xf32>
    %40 = arith.truncf %39 : vector<2x256xf32> to vector<2x256xbf16>
    %c512 = arith.constant 512 : index
    %c0_17 = arith.constant 0 : index
    %41 = vector.load %arg3[%c512, %c0_17] : memref<1024x128xbf16, #tpu.memory_space<vmem>>, vector<256x128xbf16>
    %cst_18 = arith.constant dense<0.000000e+00> : vector<2x128xf32>
    %42 = tpu.matmul %40, %41, %cst_18 {dimension_numbers = #tpu.dot_dimension_numbers<[1], [0], [0], [1], [0, 0, 1, 1], [], []>} : vector<2x256xbf16>, vector<256x128xbf16>, vector<2x128xf32> -> vector<2x128xf32>
    %43 = arith.addf %38, %42 : vector<2x128xf32>
    %44 = vector.extract_strided_slice %25 {offsets = [6, 0], sizes = [2, 256], strides = [1, 1]} : vector<8x256xf32> to vector<2x256xf32>
    %45 = arith.truncf %44 : vector<2x256xf32> to vector<2x256xbf16>
    %c768 = arith.constant 768 : index
    %c0_19 = arith.constant 0 : index
    %46 = vector.load %arg3[%c768, %c0_19] : memref<1024x128xbf16, #tpu.memory_space<vmem>>, vector<256x128xbf16>
    %cst_20 = arith.constant dense<0.000000e+00> : vector<2x128xf32>
    %47 = tpu.matmul %45, %46, %cst_20 {dimension_numbers = #tpu.dot_dimension_numbers<[1], [0], [0], [1], [0, 0, 1, 1], [], []>} : vector<2x256xbf16>, vector<256x128xbf16>, vector<2x128xf32> -> vector<2x128xf32>
    %48 = arith.addf %43, %47 : vector<2x128xf32>
    %49 = tpu.iota {dimensions = array<i32: 1>} : vector<2x128xi32>
    %c100_i32 = arith.constant 100 : i32
    %50 = vector.broadcast %c100_i32 : i32 to vector<2x128xi32>
    %51 = arith.cmpi slt, %49, %50 : vector<2x128xi32>
    %cst_21 = arith.constant 0xFF800000 : f32
    %52 = vector.broadcast %cst_21 : f32 to vector<2x128xf32>
    %53 = arith.select %51, %48, %52 : vector<2x128xi1>, vector<2x128xf32>
    %cst_22 = arith.constant dense<0xFF800000> : vector<2xf32>
    %54 = vector.multi_reduction <maximumf>, %53, %cst_22 [1] : vector<2x128xf32> to vector<2xf32>
    %55 = vector.shape_cast %54 : vector<2xf32> to vector<2x1xf32>
    %56 = vector.broadcast %55 : vector<2x1xf32> to vector<2x128xf32>
    %57 = arith.cmpf oeq, %53, %56 : vector<2x128xf32>
    %c128_i32 = arith.constant 128 : i32
    %58 = vector.broadcast %c128_i32 : i32 to vector<2x128xi32>
    %59 = arith.select %57, %49, %58 : vector<2x128xi1>, vector<2x128xi32>
    %cst_23 = arith.constant dense<2147483647> : vector<2xi32>
    %60 = vector.multi_reduction <minsi>, %59, %cst_23 [1] : vector<2x128xi32> to vector<2xi32>
    %61 = vector.shape_cast %60 : vector<2xi32> to vector<2x1xi32>
    %62 = vector.extract_strided_slice %48 {offsets = [0, 0], sizes = [2, 100], strides = [1, 1]} : vector<2x128xf32> to vector<2x100xf32>
    %c0_24 = arith.constant 0 : index
    %c0_25 = arith.constant 0 : index
    %63 = vector.load %arg5[%c0_24, %c0_25] : memref<2x100xf32, #tpu.memory_space<vmem>>, vector<2x100xf32>
    tpu.vector_store %arg5[%c0_24, %c0_25], %62 {strides = array<i32>} : memref<2x100xf32, #tpu.memory_space<vmem>>, vector<2x100xf32>,
    %c0_26 = arith.constant 0 : index
    %c0_27 = arith.constant 0 : index
    %64 = vector.load %arg6[%c0_26, %c0_27] : memref<2x1xi32, #tpu.memory_space<vmem>>, vector<2x1xi32>
    tpu.vector_store %arg6[%c0_26, %c0_27], %61 {strides = array<i32>} : memref<2x1xi32, #tpu.memory_space<vmem>>, vector<2x1xi32>,
    return
  }
}

</mosaic_0001>

<llo_original>
// kernel: classification_head_forward.1
$region0: #{classification_head_forward.1}
  #allocation0 [shape = 'u32[]', space=smem, size = 0x4, offset = 0x4, fixed_abs, tag = 'smem constant byte address 0x4 - core index']
  #allocation1 [shape = 'u32[144,128]{1,0:T(1,128)}', space=vmem, size = 0x12000, scoped, tag = 'internal scratch']
  %s0 = inlined_call_operand.vmem [shape: f32[8,256], index: 0, kind: input, shape index: {}]
  %s1 = inlined_call_operand.vmem [shape: f32[1,256], index: 1, kind: input, shape index: {}]
  %s2 = inlined_call_operand.vmem [shape: f32[1,256], index: 2, kind: input, shape index: {}]
  %s3 = inlined_call_operand.hbm [shape: bf16[1024,128], index: 3, kind: input, shape index: {}]
  %s4 = inlined_call_operand.vmem [shape: f32[1,128], index: 4, kind: input, shape index: {}]
  %s5 = inlined_call_operand.hbm [shape: f32[2,100], index: 5, kind: output, shape index: {0}]
  %s6 = inlined_call_operand.vmem [shape: s32[2,1], index: 6, kind: output, shape index: {1}]
  %7 = xla_tuple %s5, %s6
  %s8 = sld [smem:[#allocation0]]
  $region42: #{classification_head_forward.1} parent=0
    _
  %s10 = ssub.s32 1, %s8
  %s11 = scalar_select 0, %s10, %s8
  $region1: #{classification_head_forward.1} parent=0
    #allocation2 [shape = 'u8[262144]{0}', space=vmem, size = 0x40000, scoped, tag = 'input window, operand 3, single buffered']
    #allocation3 [shape = 's32[1]{0}', space=sflag, size = 0x4, scoped, tag = 'scoped memory for classification_head_forward.1']
    #allocation4 [shape = 's32[1]{0}', space=sflag, size = 0x4, scoped, tag = 'scoped memory for classification_head_forward.1']
    #allocation5 [shape = 'u8[1024]{0}', space=vmem, size = 0x400, scoped, tag = 'output window, operand 0, single buffered']
    %12 = vsyncpa [#allocation3], 0
    %13 = vsyncpa [#allocation4], 0
    // Predicated region
    $region2: #{classification_head_forward.1} parent=1 // pred_check
      _
    $region3: #{classification_head_forward.1} parent=1 // pred_check_branch
      %15 = sbr.rel (0) target = $region5
    $region4: #{classification_head_forward.1} parent=1 // pred_region
      _
    $region5: #{classification_head_forward.1} parent=1 // pred_fallthru
      _
    // Predicated region
    $region6: #{classification_head_forward.1} parent=1 // pred_check
      _
    $region7: #{classification_head_forward.1} parent=1 // pred_check_branch
      %17 = sbr.rel (0) target = $region9
    $region8: #{classification_head_forward.1} parent=1 // pred_region
      _
    $region9: #{classification_head_forward.1} parent=1 // pred_fallthru
      _
    // Predicated region
    $region10: #{classification_head_forward.1} parent=1 // pred_check
      _
    $region11: #{classification_head_forward.1} parent=1 // pred_check_branch
      %19 = sbr.rel (0) target = $region13
    $region12: #{classification_head_forward.1} parent=1 // pred_region
      _
    $region13: #{classification_head_forward.1} parent=1 // pred_fallthru
      _
    // Predicated region
    $region14: #{classification_head_forward.1} parent=1 // pred_check
      _
    $region15: #{classification_head_forward.1} parent=1 // pred_check_branch
      %21 = sbr.rel (0) target = $region17
    $region16: #{classification_head_forward.1} parent=1 // pred_region
      %s23 = ssub.s32 8192, 8192
      %24 = vsyncadd [#allocation3], %s23
      %s25 = sshll.u32 [#allocation2], 4
      %s26 = int_to_ptr.vmem [resolvable:$true] %s25
      %31 = dma.hbm_to_vmem [thread:$0]  %s3, 8192, %s26, [#allocation3], 64, 64, 4
    $region17: #{classification_head_forward.1} parent=1 // pred_fallthru
      _
    // Predicated region
    $region18: #{classification_head_forward.1} parent=1 // pred_check
      _
    $region19: #{classification_head_forward.1} parent=1 // pred_check_branch
      %33 = sbr.rel (0) target = $region21
    $region20: #{classification_head_forward.1} parent=1 // pred_region
      _
    $region21: #{classification_head_forward.1} parent=1 // pred_fallthru
      _
    // Predicated region
    $region22: #{classification_head_forward.1} parent=1 // pred_check
      _
    $region23: #{classification_head_forward.1} parent=1 // pred_check_branch
      %35 = sbr.rel (0) target = $region25
    $region24: #{classification_head_forward.1} parent=1 // pred_region
      %36 = dma.done [#allocation3], 8192
    $region25: #{classification_head_forward.1} parent=1 // pred_fallthru
      _
    %v38 = vld [vmem:[%s0] sm:$0xff]
    %v39 = vld [vmem:[%s0 + $0x8] sm:$0xff]
    %v40 = vrot.slane %v38, 4
    %v41 = vadd.f32 %v38, %v40
    %v42 = vrot.slane %v41, 2
    %v43 = vadd.f32 %v41, %v42
    %v44 = vrot.slane %v43, 1
    %v45 = vadd.f32 %v43, %v44
    %v46 = vrot.slane %v39, 4
    %v47 = vadd.f32 %v39, %v46
    %v48 = vrot.slane %v47, 2
    %v49 = vadd.f32 %v47, %v48
    %v50 = vrot.slane %v49, 1
    %v51 = vadd.f32 %v49, %v50
    %v52 = vmul.f32 %v45, 0.125
    %v53 = vmul.f32 %v51, 0.125
    %v54 = vmul.f32 %v38, %v38
    %v55 = vmul.f32 %v39, %v39
    %v56 = vrot.slane %v54, 4
    %v57 = vadd.f32 %v54, %v56
    %v58 = vrot.slane %v57, 2
    %v59 = vadd.f32 %v57, %v58
    %v60 = vrot.slane %v59, 1
    %v61 = vadd.f32 %v59, %v60
    %v62 = vrot.slane %v55, 4
    %v63 = vadd.f32 %v55, %v62
    %v64 = vrot.slane %v63, 2
    %v65 = vadd.f32 %v63, %v64
    %v66 = vrot.slane %v65, 1
    %v67 = vadd.f32 %v65, %v66
    %v68 = vmul.f32 %v61, 0.125
    %v69 = vmul.f32 %v67, 0.125
    %v70 = vmul.f32 %v52, %v52
    %v71 = vmul.f32 %v53, %v53
    %v72 = vsub.f32 %v68, %v70
    %v73 = vsub.f32 %v69, %v71
    %v74 = vmax.f32 %v72, 0.0
    %v75 = vmax.f32 %v73, 0.0
    %v76 = vld [vmem:[%s1] sm:$0x3]
    %v77 = vadd.f32 %v74, 1e-05
    %v78 = vadd.f32 %v75, 1e-05
    %v79 = vrsqrt.pop %v77
    %v80 = vrsqrt.pop %v78
    %v83 = vcombine.low %v79, %v80
    %v85 = vunpack.c.l.s4 1966171168
    %v86 = vunpack.c.0.s8 %v85
    %v87 = vlaneseq
    %v88 = vshrl.u32 %v87, 7
    %v89 = vsub.s32 %v86, %v88
    %v90 = vrot.slane %v83, %v89
    %v92 = vunpack.c.l.s4 1966171168
    %v93 = vunpack.c.0.s8 %v92
    %v94 = vlaneseq
    %v95 = vshrl.u32 %v94, 7
    %v96 = vsub.s32 %v93, %v95
    %v97 = vrot.slane %v90, %v96
    %v99 = vmul.f32 %v76, %v97
    %v100 = vld [vmem:[%s2] sm:$0x3]
    %v102 = vlaneseq
    %v103 = vshrl.u32 %v102, 7
    %v104 = vsub.s32 0, %v103
    %v105 = vrot.slane %v99, %v104
    %v106 = vlaneseq
    %v107 = vshrl.u32 %v106, 7
    %v108 = vsub.s32 1, %v107
    %v109 = vrot.slane %v99, %v108
    %v112 = vmul.f32 %v52, %v105
    %v113 = vmul.f32 %v53, %v109
    %v116 = vcombine.low %v112, %v113
    %v118 = vunpack.c.l.s4 1966171168
    %v119 = vunpack.c.0.s8 %v118
    %v120 = vlaneseq
    %v121 = vshrl.u32 %v120, 7
    %v122 = vsub.s32 %v119, %v121
    %v123 = vrot.slane %v116, %v122
    %v125 = vunpack.c.l.s4 1966171168
    %v126 = vunpack.c.0.s8 %v125
    %v127 = vlaneseq
    %v128 = vshrl.u32 %v127, 7
    %v129 = vsub.s32 %v126, %v128
    %v130 = vrot.slane %v123, %v129
    %v132 = vsub.f32 %v100, %v130
    %v133 = vmul.f32 %v38, %v105
    %v134 = vmul.f32 %v39, %v109
    %v136 = vlaneseq
    %v137 = vshrl.u32 %v136, 7
    %v138 = vsub.s32 0, %v137
    %v139 = vrot.slane %v132, %v138
    %v140 = vlaneseq
    %v141 = vshrl.u32 %v140, 7
    %v142 = vsub.s32 1, %v141
    %v143 = vrot.slane %v132, %v142
    %v146 = vadd.f32 %v133, %v139
    %v147 = vadd.f32 %v134, %v143
    %v148 = vld [vmem:[%s4] sm:$0x1]
    %v150 = vlaneseq
    %v151 = vshrl.u32 %v150, 7
    %v152 = vsub.s32 0, %v151
    %v153 = vrot.slane %v148, %v152
    %v155 = vpack.c.bf16 %v146, %v146
    %v156 = vpack.c.bf16 %v147, %v147
    %v157 = vld [vmem:[#allocation2] sm:$0xf]
    %v158 = vld [vmem:[#allocation2 + $0x4] sm:$0xf]
    %v159 = vld [vmem:[#allocation2 + $0x8] sm:$0xf]
    %v160 = vld [vmem:[#allocation2 + $0xc] sm:$0xf]
    %v161 = vld [vmem:[#allocation2 + $0x10] sm:$0xf]
    %v162 = vld [vmem:[#allocation2 + $0x14] sm:$0xf]
    %v163 = vld [vmem:[#allocation2 + $0x18] sm:$0xf]
    %v164 = vld [vmem:[#allocation2 + $0x1c] sm:$0xf]
    %v165 = vld [vmem:[#allocation2 + $0x20] sm:$0xf]
    %v166 = vld [vmem:[#allocation2 + $0x24] sm:$0xf]
    %v167 = vld [vmem:[#allocation2 + $0x28] sm:$0xf]
    %v168 = vld [vmem:[#allocation2 + $0x2c] sm:$0xf]
    %v169 = vld [vmem:[#allocation2 + $0x30] sm:$0xf]
    %v170 = vld [vmem:[#allocation2 + $0x34] sm:$0xf]
    %v171 = vld [vmem:[#allocation2 + $0x38] sm:$0xf]
    %v172 = vld [vmem:[#allocation2 + $0x3c] sm:$0xf]
    %v173 = vld [vmem:[#allocation2 + $0x40] sm:$0xf]
    %v174 = vld [vmem:[#allocation2 + $0x44] sm:$0xf]
    %v175 = vld [vmem:[#allocation2 + $0x48] sm:$0xf]
    %v176 = vld [vmem:[#allocation2 + $0x4c] sm:$0xf]
    %v177 = vld [vmem:[#allocation2 + $0x50] sm:$0xf]
    %v178 = vld [vmem:[#allocation2 + $0x54] sm:$0xf]
    %v179 = vld [vmem:[#allocation2 + $0x58] sm:$0xf]
    %v180 = vld [vmem:[#allocation2 + $0x5c] sm:$0xf]
    %v181 = vld [vmem:[#allocation2 + $0x60] sm:$0xf]
    %v182 = vld [vmem:[#allocation2 + $0x64] sm:$0xf]
    %v183 = vld [vmem:[#allocation2 + $0x68] sm:$0xf]
    %v184 = vld [vmem:[#allocation2 + $0x6c] sm:$0xf]
    %v185 = vld [vmem:[#allocation2 + $0x70] sm:$0xf]
    %v186 = vld [vmem:[#allocation2 + $0x74] sm:$0xf]
    %v187 = vld [vmem:[#allocation2 + $0x78] sm:$0xf]
    %v188 = vld [vmem:[#allocation2 + $0x7c] sm:$0xf]
    %v221 = vunpack.c.l.b16 %v157
    %v222 = vunpack.c.l.b16 %v158
    %v223 = vunpack.c.l.b16 %v159
    %v224 = vunpack.c.l.b16 %v160
    %v225 = vunpack.c.l.b16 %v161
    %v226 = vunpack.c.l.b16 %v162
    %v227 = vunpack.c.l.b16 %v163
    %v228 = vunpack.c.l.b16 %v164
    %v229 = vunpack.c.l.b16 %v165
    %v230 = vunpack.c.l.b16 %v166
    %v231 = vunpack.c.l.b16 %v167
    %v232 = vunpack.c.l.b16 %v168
    %v233 = vunpack.c.l.b16 %v169
    %v234 = vunpack.c.l.b16 %v170
    %v235 = vunpack.c.l.b16 %v171
    %v236 = vunpack.c.l.b16 %v172
    %v237 = vunpack.c.l.b16 %v173
    %v238 = vunpack.c.l.b16 %v174
    %v239 = vunpack.c.l.b16 %v175
    %v240 = vunpack.c.l.b16 %v176
    %v241 = vunpack.c.l.b16 %v177
    %v242 = vunpack.c.l.b16 %v178
    %v243 = vunpack.c.l.b16 %v179
    %v244 = vunpack.c.l.b16 %v180
    %v245 = vunpack.c.l.b16 %v181
    %v246 = vunpack.c.l.b16 %v182
    %v247 = vunpack.c.l.b16 %v183
    %v248 = vunpack.c.l.b16 %v184
    %v249 = vunpack.c.l.b16 %v185
    %v250 = vunpack.c.l.b16 %v186
    %v251 = vunpack.c.l.b16 %v187
    %v252 = vunpack.c.l.b16 %v188
    %v253 = vpack.c.b16 %v222, %v221
    %v254 = vpack.c.b16 %v224, %v223
    %v255 = vpack.c.b16 %v226, %v225
    %v256 = vpack.c.b16 %v228, %v227
    %v257 = vpack.c.b16 %v230, %v229
    %v258 = vpack.c.b16 %v232, %v231
    %v259 = vpack.c.b16 %v234, %v233
    %v260 = vpack.c.b16 %v236, %v235
    %v261 = vpack.c.b16 %v238, %v237
    %v262 = vpack.c.b16 %v240, %v239
    %v263 = vpack.c.b16 %v242, %v241
    %v264 = vpack.c.b16 %v244, %v243
    %v265 = vpack.c.b16 %v246, %v245
    %v266 = vpack.c.b16 %v248, %v247
    %v267 = vpack.c.b16 %v250, %v249
    %v268 = vpack.c.b16 %v252, %v251
    %285 = vmatprep.subr.bf16.mxu0 0
    %286 = vmatpush1.bf16.msra.mxu0 %v253
    %287 = vmatprep.subr.bf16.mxu0 0
    %288 = vmatpush1.bf16.msra.mxu0 %v254
    %289 = vmatprep.subr.bf16.mxu0 0
    %290 = vmatpush1.bf16.msra.mxu0 %v255
    %291 = vmatprep.subr.bf16.mxu0 0
    %292 = vmatpush1.bf16.msra.mxu0 %v256
    %293 = vmatprep.subr.bf16.mxu0 0
    %294 = vmatpush1.bf16.msra.mxu0 %v257
    %295 = vmatprep.subr.bf16.mxu0 0
    %296 = vmatpush1.bf16.msra.mxu0 %v258
    %297 = vmatprep.subr.bf16.mxu0 0
    %298 = vmatpush1.bf16.msra.mxu0 %v259
    %299 = vmatprep.subr.bf16.mxu0 0
    %300 = vmatpush1.bf16.msra.mxu0 %v260
    %301 = vmatprep.subr.bf16.mxu0 0
    %302 = vmatpush1.bf16.msra.mxu0 %v261
    %303 = vmatprep.subr.bf16.mxu0 0
    %304 = vmatpush1.bf16.msra.mxu0 %v262
    %305 = vmatprep.subr.bf16.mxu0 0
    %306 = vmatpush1.bf16.msra.mxu0 %v263
    %307 = vmatprep.subr.bf16.mxu0 0
    %308 = vmatpush1.bf16.msra.mxu0 %v264
    %309 = vmatprep.subr.bf16.mxu0 0
    %310 = vmatpush1.bf16.msra.mxu0 %v265
    %311 = vmatprep.subr.bf16.mxu0 0
    %312 = vmatpush1.bf16.msra.mxu0 %v266
    %313 = vmatprep.subr.bf16.mxu0 0
    %314 = vmatpush1.bf16.msra.mxu0 %v267
    %315 = vmatprep.subr.bf16.mxu0 0
    %316 = vmatpush1.bf16.msra.mxu0 %v268
    %317 = vmatprep.mubr.bf16.mxu0 %v156
    %318 = vmatmul.mubr.bf16.gmra.mrb[0].mxu0 %v155
    %v319 = vpop.f32.mrb[0].mxu0
    %v320 = vadd.f32 0.0, %v319
    %v321 = vpop.f32.mrb[0].mxu0
    %v322 = vpop.f32.mrb[0].mxu0
    %v323 = vpop.f32.mrb[0].mxu0
    %324 = vdwg.mxu0
    %v325 = vadd.f32 %v153, %v320
    %v326 = vld [vmem:[#allocation2 + $0x80] sm:$0xf]
    %v327 = vld [vmem:[#allocation2 + $0x84] sm:$0xf]
    %v328 = vld [vmem:[#allocation2 + $0x88] sm:$0xf]
    %v329 = vld [vmem:[#allocation2 + $0x8c] sm:$0xf]
    %v330 = vld [vmem:[#allocation2 + $0x90] sm:$0xf]
    %v331 = vld [vmem:[#allocation2 + $0x94] sm:$0xf]
    %v332 = vld [vmem:[#allocation2 + $0x98] sm:$0xf]
    %v333 = vld [vmem:[#allocation2 + $0x9c] sm:$0xf]
    %v334 = vld [vmem:[#allocation2 + $0xa0] sm:$0xf]
    %v335 = vld [vmem:[#allocation2 + $0xa4] sm:$0xf]
    %v336 = vld [vmem:[#allocation2 + $0xa8] sm:$0xf]
    %v337 = vld [vmem:[#allocation2 + $0xac] sm:$0xf]
    %v338 = vld [vmem:[#allocation2 + $0xb0] sm:$0xf]
    %v339 = vld [vmem:[#allocation2 + $0xb4] sm:$0xf]
    %v340 = vld [vmem:[#allocation2 + $0xb8] sm:$0xf]
    %v341 = vld [vmem:[#allocation2 + $0xbc] sm:$0xf]
    %v342 = vld [vmem:[#allocation2 + $0xc0] sm:$0xf]
    %v343 = vld [vmem:[#allocation2 + $0xc4] sm:$0xf]
    %v344 = vld [vmem:[#allocation2 + $0xc8] sm:$0xf]
    %v345 = vld [vmem:[#allocation2 + $0xcc] sm:$0xf]
    %v346 = vld [vmem:[#allocation2 + $0xd0] sm:$0xf]
    %v347 = vld [vmem:[#allocation2 + $0xd4] sm:$0xf]
    %v348 = vld [vmem:[#allocation2 + $0xd8] sm:$0xf]
    %v349 = vld [vmem:[#allocation2 + $0xdc] sm:$0xf]
    %v350 = vld [vmem:[#allocation2 + $0xe0] sm:$0xf]
    %v351 = vld [vmem:[#allocation2 + $0xe4] sm:$0xf]
    %v352 = vld [vmem:[#allocation2 + $0xe8] sm:$0xf]
    %v353 = vld [vmem:[#allocation2 + $0xec] sm:$0xf]
    %v354 = vld [vmem:[#allocation2 + $0xf0] sm:$0xf]
    %v355 = vld [vmem:[#allocation2 + $0xf4] sm:$0xf]
    %v356 = vld [vmem:[#allocation2 + $0xf8] sm:$0xf]
    %v357 = vld [vmem:[#allocation2 + $0xfc] sm:$0xf]
    %v360 = vrot.slane %v155, 1
    %v361 = vrot.slane %v156, 1
    %v396 = vunpack.c.l.b16 %v326
    %v397 = vunpack.c.l.b16 %v327
    %v398 = vunpack.c.l.b16 %v328
    %v399 = vunpack.c.l.b16 %v329
    %v400 = vunpack.c.l.b16 %v330
    %v401 = vunpack.c.l.b16 %v331
    %v402 = vunpack.c.l.b16 %v332
    %v403 = vunpack.c.l.b16 %v333
    %v404 = vunpack.c.l.b16 %v334
    %v405 = vunpack.c.l.b16 %v335
    %v406 = vunpack.c.l.b16 %v336
    %v407 = vunpack.c.l.b16 %v337
    %v408 = vunpack.c.l.b16 %v338
    %v409 = vunpack.c.l.b16 %v339
    %v410 = vunpack.c.l.b16 %v340
    %v411 = vunpack.c.l.b16 %v341
    %v412 = vunpack.c.l.b16 %v342
    %v413 = vunpack.c.l.b16 %v343
    %v414 = vunpack.c.l.b16 %v344
    %v415 = vunpack.c.l.b16 %v345
    %v416 = vunpack.c.l.b16 %v346
    %v417 = vunpack.c.l.b16 %v347
    %v418 = vunpack.c.l.b16 %v348
    %v419 = vunpack.c.l.b16 %v349
    %v420 = vunpack.c.l.b16 %v350
    %v421 = vunpack.c.l.b16 %v351
    %v422 = vunpack.c.l.b16 %v352
    %v423 = vunpack.c.l.b16 %v353
    %v424 = vunpack.c.l.b16 %v354
    %v425 = vunpack.c.l.b16 %v355
    %v426 = vunpack.c.l.b16 %v356
    %v427 = vunpack.c.l.b16 %v357
    %v428 = vpack.c.b16 %v397, %v396
    %v429 = vpack.c.b16 %v399, %v398
    %v430 = vpack.c.b16 %v401, %v400
    %v431 = vpack.c.b16 %v403, %v402
    %v432 = vpack.c.b16 %v405, %v404
    %v433 = vpack.c.b16 %v407, %v406
    %v434 = vpack.c.b16 %v409, %v408
    %v435 = vpack.c.b16 %v411, %v410
    %v436 = vpack.c.b16 %v413, %v412
    %v437 = vpack.c.b16 %v415, %v414
    %v438 = vpack.c.b16 %v417, %v416
    %v439 = vpack.c.b16 %v419, %v418
    %v440 = vpack.c.b16 %v421, %v420
    %v441 = vpack.c.b16 %v423, %v422
    %v442 = vpack.c.b16 %v425, %v424
    %v443 = vpack.c.b16 %v427, %v426
    %460 = vmatprep.subr.bf16.mxu0 0
    %461 = vmatpush1.bf16.msra.mxu0 %v428
    %462 = vmatprep.subr.bf16.mxu0 0
    %463 = vmatpush1.bf16.msra.mxu0 %v429
    %464 = vmatprep.subr.bf16.mxu0 0
    %465 = vmatpush1.bf16.msra.mxu0 %v430
    %466 = vmatprep.subr.bf16.mxu0 0
    %467 = vmatpush1.bf16.msra.mxu0 %v431
    %468 = vmatprep.subr.bf16.mxu0 0
    %469 = vmatpush1.bf16.msra.mxu0 %v432
    %470 = vmatprep.subr.bf16.mxu0 0
    %471 = vmatpush1.bf16.msra.mxu0 %v433
    %472 = vmatprep.subr.bf16.mxu0 0
    %473 = vmatpush1.bf16.msra.mxu0 %v434
    %474 = vmatprep.subr.bf16.mxu0 0
    %475 = vmatpush1.bf16.msra.mxu0 %v435
    %476 = vmatprep.subr.bf16.mxu0 0
    %477 = vmatpush1.bf16.msra.mxu0 %v436
    %478 = vmatprep.subr.bf16.mxu0 0
    %479 = vmatpush1.bf16.msra.mxu0 %v437
    %480 = vmatprep.subr.bf16.mxu0 0
    %481 = vmatpush1.bf16.msra.mxu0 %v438
    %482 = vmatprep.subr.bf16.mxu0 0
    %483 = vmatpush1.bf16.msra.mxu0 %v439
    %484 = vmatprep.subr.bf16.mxu0 0
    %485 = vmatpush1.bf16.msra.mxu0 %v440
    %486 = vmatprep.subr.bf16.mxu0 0
    %487 = vmatpush1.bf16.msra.mxu0 %v441
    %488 = vmatprep.subr.bf16.mxu0 0
    %489 = vmatpush1.bf16.msra.mxu0 %v442
    %490 = vmatprep.subr.bf16.mxu0 0
    %491 = vmatpush1.bf16.msra.mxu0 %v443
    %492 = vmatprep.mubr.bf16.mxu0 %v361
    %493 = vmatmul.mubr.bf16.gmra.mrb[0].mxu0 %v360
    %v494 = vpop.f32.mrb[0].mxu0
    %v495 = vadd.f32 0.0, %v494
    %v496 = vpop.f32.mrb[0].mxu0
    %v497 = vpop.f32.mrb[0].mxu0
    %v498 = vpop.f32.mrb[0].mxu0
    %499 = vdwg.mxu0
    %v500 = vadd.f32 %v325, %v495
    %v501 = vld [vmem:[#allocation2 + $0x100] sm:$0xf]
    %v502 = vld [vmem:[#allocation2 + $0x104] sm:$0xf]
    %v503 = vld [vmem:[#allocation2 + $0x108] sm:$0xf]
    %v504 = vld [vmem:[#allocation2 + $0x10c] sm:$0xf]
    %v505 = vld [vmem:[#allocation2 + $0x110] sm:$0xf]
    %v506 = vld [vmem:[#allocation2 + $0x114] sm:$0xf]
    %v507 = vld [vmem:[#allocation2 + $0x118] sm:$0xf]
    %v508 = vld [vmem:[#allocation2 + $0x11c] sm:$0xf]
    %v509 = vld [vmem:[#allocation2 + $0x120] sm:$0xf]
    %v510 = vld [vmem:[#allocation2 + $0x124] sm:$0xf]
    %v511 = vld [vmem:[#allocation2 + $0x128] sm:$0xf]
    %v512 = vld [vmem:[#allocation2 + $0x12c] sm:$0xf]
    %v513 = vld [vmem:[#allocation2 + $0x130] sm:$0xf]
    %v514 = vld [vmem:[#allocation2 + $0x134] sm:$0xf]
    %v515 = vld [vmem:[#allocation2 + $0x138] sm:$0xf]
    %v516 = vld [vmem:[#allocation2 + $0x13c] sm:$0xf]
    %v517 = vld [vmem:[#allocation2 + $0x140] sm:$0xf]
    %v518 = vld [vmem:[#allocation2 + $0x144] sm:$0xf]
    %v519 = vld [vmem:[#allocation2 + $0x148] sm:$0xf]
    %v520 = vld [vmem:[#allocation2 + $0x14c] sm:$0xf]
    %v521 = vld [vmem:[#allocation2 + $0x150] sm:$0xf]
    %v522 = vld [vmem:[#allocation2 + $0x154] sm:$0xf]
    %v523 = vld [vmem:[#allocation2 + $0x158] sm:$0xf]
    %v524 = vld [vmem:[#allocation2 + $0x15c] sm:$0xf]
    %v525 = vld [vmem:[#allocation2 + $0x160] sm:$0xf]
    %v526 = vld [vmem:[#allocation2 + $0x164] sm:$0xf]
    %v527 = vld [vmem:[#allocation2 + $0x168] sm:$0xf]
    %v528 = vld [vmem:[#allocation2 + $0x16c] sm:$0xf]
    %v529 = vld [vmem:[#allocation2 + $0x170] sm:$0xf]
    %v530 = vld [vmem:[#allocation2 + $0x174] sm:$0xf]
    %v531 = vld [vmem:[#allocation2 + $0x178] sm:$0xf]
    %v532 = vld [vmem:[#allocation2 + $0x17c] sm:$0xf]
    %v533 = vrot.slane %v155, 2
    %v534 = vrot.slane %v156, 2
    %v569 = vunpack.c.l.b16 %v501
    %v570 = vunpack.c.l.b16 %v502
    %v571 = vunpack.c.l.b16 %v503
    %v572 = vunpack.c.l.b16 %v504
    %v573 = vunpack.c.l.b16 %v505
    %v574 = vunpack.c.l.b16 %v506
    %v575 = vunpack.c.l.b16 %v507
    %v576 = vunpack.c.l.b16 %v508
    %v577 = vunpack.c.l.b16 %v509
    %v578 = vunpack.c.l.b16 %v510
    %v579 = vunpack.c.l.b16 %v511
    %v580 = vunpack.c.l.b16 %v512
    %v581 = vunpack.c.l.b16 %v513
    %v582 = vunpack.c.l.b16 %v514
    %v583 = vunpack.c.l.b16 %v515
    %v584 = vunpack.c.l.b16 %v516
    %v585 = vunpack.c.l.b16 %v517
    %v586 = vunpack.c.l.b16 %v518
    %v587 = vunpack.c.l.b16 %v519
    %v588 = vunpack.c.l.b16 %v520
    %v589 = vunpack.c.l.b16 %v521
    %v590 = vunpack.c.l.b16 %v522
    %v591 = vunpack.c.l.b16 %v523
    %v592 = vunpack.c.l.b16 %v524
    %v593 = vunpack.c.l.b16 %v525
    %v594 = vunpack.c.l.b16 %v526
    %v595 = vunpack.c.l.b16 %v527
    %v596 = vunpack.c.l.b16 %v528
    %v597 = vunpack.c.l.b16 %v529
    %v598 = vunpack.c.l.b16 %v530
    %v599 = vunpack.c.l.b16 %v531
    %v600 = vunpack.c.l.b16 %v532
    %v601 = vpack.c.b16 %v570, %v569
    %v602 = vpack.c.b16 %v572, %v571
    %v603 = vpack.c.b16 %v574, %v573
    %v604 = vpack.c.b16 %v576, %v575
    %v605 = vpack.c.b16 %v578, %v577
    %v606 = vpack.c.b16 %v580, %v579
    %v607 = vpack.c.b16 %v582, %v581
    %v608 = vpack.c.b16 %v584, %v583
    %v609 = vpack.c.b16 %v586, %v585
    %v610 = vpack.c.b16 %v588, %v587
    %v611 = vpack.c.b16 %v590, %v589
    %v612 = vpack.c.b16 %v592, %v591
    %v613 = vpack.c.b16 %v594, %v593
    %v614 = vpack.c.b16 %v596, %v595
    %v615 = vpack.c.b16 %v598, %v597
    %v616 = vpack.c.b16 %v600, %v599
    %633 = vmatprep.subr.bf16.mxu0 0
    %634 = vmatpush1.bf16.msra.mxu0 %v601
    %635 = vmatprep.subr.bf16.mxu0 0
    %636 = vmatpush1.bf16.msra.mxu0 %v602
    %637 = vmatprep.subr.bf16.mxu0 0
    %638 = vmatpush1.bf16.msra.mxu0 %v603
    %639 = vmatprep.subr.bf16.mxu0 0
    %640 = vmatpush1.bf16.msra.mxu0 %v604
    %641 = vmatprep.subr.bf16.mxu0 0
    %642 = vmatpush1.bf16.msra.mxu0 %v605
    %643 = vmatprep.subr.bf16.mxu0 0
    %644 = vmatpush1.bf16.msra.mxu0 %v606
    %645 = vmatprep.subr.bf16.mxu0 0
    %646 = vmatpush1.bf16.msra.mxu0 %v607
    %647 = vmatprep.subr.bf16.mxu0 0
    %648 = vmatpush1.bf16.msra.mxu0 %v608
    %649 = vmatprep.subr.bf16.mxu0 0
    %650 = vmatpush1.bf16.msra.mxu0 %v609
    %651 = vmatprep.subr.bf16.mxu0 0
    %652 = vmatpush1.bf16.msra.mxu0 %v610
    %653 = vmatprep.subr.bf16.mxu0 0
    %654 = vmatpush1.bf16.msra.mxu0 %v611
    %655 = vmatprep.subr.bf16.mxu0 0
    %656 = vmatpush1.bf16.msra.mxu0 %v612
    %657 = vmatprep.subr.bf16.mxu0 0
    %658 = vmatpush1.bf16.msra.mxu0 %v613
    %659 = vmatprep.subr.bf16.mxu0 0
    %660 = vmatpush1.bf16.msra.mxu0 %v614
    %661 = vmatprep.subr.bf16.mxu0 0
    %662 = vmatpush1.bf16.msra.mxu0 %v615
    %663 = vmatprep.subr.bf16.mxu0 0
    %664 = vmatpush1.bf16.msra.mxu0 %v616
    %665 = vmatprep.mubr.bf16.mxu0 %v534
    %666 = vmatmul.mubr.bf16.gmra.mrb[0].mxu0 %v533
    %v667 = vpop.f32.mrb[0].mxu0
    %v668 = vadd.f32 0.0, %v667
    %v669 = vpop.f32.mrb[0].mxu0
    %v670 = vpop.f32.mrb[0].mxu0
    %v671 = vpop.f32.mrb[0].mxu0
    %672 = vdwg.mxu0
    %v673 = vadd.f32 %v500, %v668
    %v674 = vld [vmem:[#allocation2 + $0x180] sm:$0xf]
    %v675 = vld [vmem:[#allocation2 + $0x184] sm:$0xf]
    %v676 = vld [vmem:[#allocation2 + $0x188] sm:$0xf]
    %v677 = vld [vmem:[#allocation2 + $0x18c] sm:$0xf]
    %v678 = vld [vmem:[#allocation2 + $0x190] sm:$0xf]
    %v679 = vld [vmem:[#allocation2 + $0x194] sm:$0xf]
    %v680 = vld [vmem:[#allocation2 + $0x198] sm:$0xf]
    %v681 = vld [vmem:[#allocation2 + $0x19c] sm:$0xf]
    %v682 = vld [vmem:[#allocation2 + $0x1a0] sm:$0xf]
    %v683 = vld [vmem:[#allocation2 + $0x1a4] sm:$0xf]
    %v684 = vld [vmem:[#allocation2 + $0x1a8] sm:$0xf]
    %v685 = vld [vmem:[#allocation2 + $0x1ac] sm:$0xf]
    %v686 = vld [vmem:[#allocation2 + $0x1b0] sm:$0xf]
    %v687 = vld [vmem:[#allocation2 + $0x1b4] sm:$0xf]
    %v688 = vld [vmem:[#allocation2 + $0x1b8] sm:$0xf]
    %v689 = vld [vmem:[#allocation2 + $0x1bc] sm:$0xf]
    %v690 = vld [vmem:[#allocation2 + $0x1c0] sm:$0xf]
    %v691 = vld [vmem:[#allocation2 + $0x1c4] sm:$0xf]
    %v692 = vld [vmem:[#allocation2 + $0x1c8] sm:$0xf]
    %v693 = vld [vmem:[#allocation2 + $0x1cc] sm:$0xf]
    %v694 = vld [vmem:[#allocation2 + $0x1d0] sm:$0xf]
    %v695 = vld [vmem:[#allocation2 + $0x1d4] sm:$0xf]
    %v696 = vld [vmem:[#allocation2 + $0x1d8] sm:$0xf]
    %v697 = vld [vmem:[#allocation2 + $0x1dc] sm:$0xf]
    %v698 = vld [vmem:[#allocation2 + $0x1e0] sm:$0xf]
    %v699 = vld [vmem:[#allocation2 + $0x1e4] sm:$0xf]
    %v700 = vld [vmem:[#allocation2 + $0x1e8] sm:$0xf]
    %v701 = vld [vmem:[#allocation2 + $0x1ec] sm:$0xf]
    %v702 = vld [vmem:[#allocation2 + $0x1f0] sm:$0xf]
    %v703 = vld [vmem:[#allocation2 + $0x1f4] sm:$0xf]
    %v704 = vld [vmem:[#allocation2 + $0x1f8] sm:$0xf]
    %v705 = vld [vmem:[#allocation2 + $0x1fc] sm:$0xf]
    %v706 = vrot.slane %v155, 3
    %v707 = vrot.slane %v156, 3
    %v742 = vunpack.c.l.b16 %v674
    %v743 = vunpack.c.l.b16 %v675
    %v744 = vunpack.c.l.b16 %v676
    %v745 = vunpack.c.l.b16 %v677
    %v746 = vunpack.c.l.b16 %v678
    %v747 = vunpack.c.l.b16 %v679
    %v748 = vunpack.c.l.b16 %v680
    %v749 = vunpack.c.l.b16 %v681
    %v750 = vunpack.c.l.b16 %v682
    %v751 = vunpack.c.l.b16 %v683
    %v752 = vunpack.c.l.b16 %v684
    %v753 = vunpack.c.l.b16 %v685
    %v754 = vunpack.c.l.b16 %v686
    %v755 = vunpack.c.l.b16 %v687
    %v756 = vunpack.c.l.b16 %v688
    %v757 = vunpack.c.l.b16 %v689
    %v758 = vunpack.c.l.b16 %v690
    %v759 = vunpack.c.l.b16 %v691
    %v760 = vunpack.c.l.b16 %v692
    %v761 = vunpack.c.l.b16 %v693
    %v762 = vunpack.c.l.b16 %v694
    %v763 = vunpack.c.l.b16 %v695
    %v764 = vunpack.c.l.b16 %v696
    %v765 = vunpack.c.l.b16 %v697
    %v766 = vunpack.c.l.b16 %v698
    %v767 = vunpack.c.l.b16 %v699
    %v768 = vunpack.c.l.b16 %v700
    %v769 = vunpack.c.l.b16 %v701
    %v770 = vunpack.c.l.b16 %v702
    %v771 = vunpack.c.l.b16 %v703
    %v772 = vunpack.c.l.b16 %v704
    %v773 = vunpack.c.l.b16 %v705
    %v774 = vpack.c.b16 %v743, %v742
    %v775 = vpack.c.b16 %v745, %v744
    %v776 = vpack.c.b16 %v747, %v746
    %v777 = vpack.c.b16 %v749, %v748
    %v778 = vpack.c.b16 %v751, %v750
    %v779 = vpack.c.b16 %v753, %v752
    %v780 = vpack.c.b16 %v755, %v754
    %v781 = vpack.c.b16 %v757, %v756
    %v782 = vpack.c.b16 %v759, %v758
    %v783 = vpack.c.b16 %v761, %v760
    %v784 = vpack.c.b16 %v763, %v762
    %v785 = vpack.c.b16 %v765, %v764
    %v786 = vpack.c.b16 %v767, %v766
    %v787 = vpack.c.b16 %v769, %v768
    %v788 = vpack.c.b16 %v771, %v770
    %v789 = vpack.c.b16 %v773, %v772
    %806 = vmatprep.subr.bf16.mxu0 0
    %807 = vmatpush1.bf16.msra.mxu0 %v774
    %808 = vmatprep.subr.bf16.mxu0 0
    %809 = vmatpush1.bf16.msra.mxu0 %v775
    %810 = vmatprep.subr.bf16.mxu0 0
    %811 = vmatpush1.bf16.msra.mxu0 %v776
    %812 = vmatprep.subr.bf16.mxu0 0
    %813 = vmatpush1.bf16.msra.mxu0 %v777
    %814 = vmatprep.subr.bf16.mxu0 0
    %815 = vmatpush1.bf16.msra.mxu0 %v778
    %816 = vmatprep.subr.bf16.mxu0 0
    %817 = vmatpush1.bf16.msra.mxu0 %v779
    %818 = vmatprep.subr.bf16.mxu0 0
    %819 = vmatpush1.bf16.msra.mxu0 %v780
    %820 = vmatprep.subr.bf16.mxu0 0
    %821 = vmatpush1.bf16.msra.mxu0 %v781
    %822 = vmatprep.subr.bf16.mxu0 0
    %823 = vmatpush1.bf16.msra.mxu0 %v782
    %824 = vmatprep.subr.bf16.mxu0 0
    %825 = vmatpush1.bf16.msra.mxu0 %v783
    %826 = vmatprep.subr.bf16.mxu0 0
    %827 = vmatpush1.bf16.msra.mxu0 %v784
    %828 = vmatprep.subr.bf16.mxu0 0
    %829 = vmatpush1.bf16.msra.mxu0 %v785
    %830 = vmatprep.subr.bf16.mxu0 0
    %831 = vmatpush1.bf16.msra.mxu0 %v786
    %832 = vmatprep.subr.bf16.mxu0 0
    %833 = vmatpush1.bf16.msra.mxu0 %v787
    %834 = vmatprep.subr.bf16.mxu0 0
    %835 = vmatpush1.bf16.msra.mxu0 %v788
    %836 = vmatprep.subr.bf16.mxu0 0
    %837 = vmatpush1.bf16.msra.mxu0 %v789
    %838 = vmatprep.mubr.bf16.mxu0 %v707
    %839 = vmatmul.mubr.bf16.gmra.mrb[0].mxu0 %v706
    %v840 = vpop.f32.mrb[0].mxu0
    %v841 = vadd.f32 0.0, %v840
    %v842 = vpop.f32.mrb[0].mxu0
    %v843 = vpop.f32.mrb[0].mxu0
    %v844 = vpop.f32.mrb[0].mxu0
    %845 = vdwg.mxu0
    %v846 = vadd.f32 %v673, %v841
    %v847 = vlaneseq
    %v848 = vand.u32 %v847, 127
    %vm849 = vcmp.lt.s32.totalorder %v848, 100
    %v850 = vsel %vm849, %v846, -inf
    %vm851 = vcmask 1041408
    %v852 = vsel %vm851, %v850, -inf
    %853 = vmax.xlane.f32.xlu0 %v852
    %v854 = vpop.xlane.xlu0 %853
    %vm855 = vcmp.eq.f32.partialorder %v850, %v854
    %v856 = vsel %vm855, %v848, 128
    %v857 = vsel %vm851, %v856, 2147483647
    %v858 = vand.u32 %v857, 65535
    %v859 = vshra.s32 %v857, 16
    %v860 = vcvt.s32.f32 %v858
    %v861 = vcvt.s32.f32 %v859
    %862 = vmin.xlane.f32.xlu0 %v861
    %v863 = vpop.xlane.xlu0 %862
    %vm864 = vcmp.eq.f32.partialorder %v861, %v863
    %v865 = vsel %vm864, %v860, inf
    %866 = vmin.xlane.f32.xlu0 %v865
    %v867 = vpop.xlane.xlu0 %866
    %v868 = vcvt.f32.s32 %v867
    %v869 = vcvt.f32.s32 %v863
    %v870 = vshll.u32 %v869, 16
    %v871 = vadd.s32 %v870, %v868
    %vm872 = vcmask 812032
    %873 = vst.msk [vmem:[#allocation5] sm:$0x3] %vm872, %v846
    %vm874 = vcmask 1024
    %875 = vst.msk [vmem:[%s6] sm:$0x3] %vm874, %v871
    // Predicated region
    $region26: #{classification_head_forward.1} parent=1 // pred_check
      _
    $region27: #{classification_head_forward.1} parent=1 // pred_check_branch
      %877 = sbr.rel (0) target = $region29
    $region28: #{classification_head_forward.1} parent=1 // pred_region
      %s879 = ssub.s32 32, 32
      %880 = vsyncadd [#allocation4], %s879
      %s882 = sshll.u32 [#allocation5], 4
      %s883 = int_to_ptr.vmem [resolvable:$true] %s882
      %885 = dma.vmem_to_hbm [thread:$0]  %s883, 32, %s5, [#allocation4]
    $region29: #{classification_head_forward.1} parent=1 // pred_fallthru
      _
    // Predicated region
    $region30: #{classification_head_forward.1} parent=1 // pred_check
      _
    $region31: #{classification_head_forward.1} parent=1 // pred_check_branch
      %887 = sbr.rel (0) target = $region33
    $region32: #{classification_head_forward.1} parent=1 // pred_region
      _
    $region33: #{classification_head_forward.1} parent=1 // pred_fallthru
      _
    // Predicated region
    $region34: #{classification_head_forward.1} parent=1 // pred_check
      _
    $region35: #{classification_head_forward.1} parent=1 // pred_check_branch
      %889 = sbr.rel (0) target = $region37
    $region36: #{classification_head_forward.1} parent=1 // pred_region
      %890 = dma.done [#allocation4], 32
    $region37: #{classification_head_forward.1} parent=1 // pred_fallthru
      _
    // Predicated region
    $region38: #{classification_head_forward.1} parent=1 // pred_check
      _
    $region39: #{classification_head_forward.1} parent=1 // pred_check_branch
      %892 = sbr.rel (0) target = $region41
    $region40: #{classification_head_forward.1} parent=1 // pred_region
      _
    $region41: #{classification_head_forward.1} parent=1 // pred_fallthru
      _
    %893 = vsyncpa [#allocation3], 1
    %894 = vsyncpa [#allocation4], 1

</llo_original>
